<compile_context>
chip_gen: v7x
topology: tpu7x:2x2x1
jax: 0.10.0
libtpu: 0.0.40
codegen_flags: <defaults>
</compile_context>

<pallas_src>
import functools

import jax
import jax.numpy as jnp
from jax.experimental import pallas as pl
from jax.experimental.pallas import tpu as pltpu

LAYERS = [2, 128, 128, 128, 128, 1]
HIDDEN = 128
DIN = 2


def mlp_kernel(x_ref, w0t_ref, wht_ref, w4c_ref, bht_ref, b4_ref, o_ref, *,
               matmul_dtype, tanh_dtype):
    """Full 5-layer MLP forward for one tile of `tile_m` batch columns.

    All activations are feature-major: (HIDDEN, tile_m).

    x_ref   : (2, tile_m)      input coords, transposed (lane-dense)
    w0t_ref : (128, 2)         layer-0 weight, transposed (out, in), f32
    wht_ref : (3, 128, 128)    hidden weights W_l^T (out, in), matmul_dtype
    w4c_ref : (128, 1)         last-layer weight column, f32
    bht_ref : (128, 4)         biases of layers 0..3 as columns, f32
    b4_ref  : (1, 1)           last-layer bias scalar (SMEM)
    o_ref   : (1, tile_m)      lane-dense output row
    """
    xt = x_ref[...]            # (2, tile_m) f32
    w0t = w0t_ref[...]         # (128, 2)    f32

    # Layer 0 (K=2): two VPU broadcast FMAs instead of a degenerate MXU pass.
    # (128,1) columns broadcast along lanes, (1,tile_m) rows along sublanes.
    pre = (w0t[:, 0:1] * xt[0:1, :]
           + w0t[:, 1:2] * xt[1:2, :]
           + bht_ref[:, 0:1])                                   # (128, tile_m) f32
    h = jnp.tanh(pre.astype(tanh_dtype)).astype(matmul_dtype)

    # Layers 1..3: (128,128) @ (128,tile_m) MXU matmuls, f32 accumulation,
    # tanh on the EUP (bf16 on v6e/v7x if tanh_dtype==bf16).
    for l in range(3):
        acc = jnp.dot(wht_ref[l], h, preferred_element_type=jnp.float32)
        pre = acc + bht_ref[:, l + 1:l + 2]                     # f32 + lane-bcast col
        h = jnp.tanh(pre.astype(tanh_dtype)).astype(matmul_dtype)

    # Layer 4 (out_features=1): VPU multiply + cross-sublane reduce; the result
    # is already the lane-dense (1, tile_m) row -- no transpose, no MXU pass.
    out_row = jnp.sum(h.astype(jnp.float32) * w4c_ref[...],
                      axis=0, keepdims=True)                    # (1, tile_m) f32
    o_ref[...] = (out_row + b4_ref[0, 0]).astype(o_ref.dtype)


def pack_params(params, *, matmul_dtype=jnp.bfloat16):
    """Pack the 10 torch-style (W as (in,out), b as (1,out)) params ONCE.

    matmul_dtype=jnp.bfloat16 : fast path (bf16 MXU operands, f32 accumulation)
    matmul_dtype=jnp.float32  : exact path (multi-pass f32 MXU)
    """
    assert len(params) == 10
    w0t = jnp.asarray(params[0]).T.astype(jnp.float32)                 # (128, 2)
    wht = jnp.stack([jnp.asarray(params[2]).T,
                     jnp.asarray(params[4]).T,
                     jnp.asarray(params[6]).T]).astype(matmul_dtype)   # (3,128,128)
    w4c = jnp.asarray(params[8]).astype(jnp.float32)                   # (128, 1)
    bht = jnp.concatenate([jnp.asarray(params[2 * i + 1]).T
                           for i in range(4)], axis=1).astype(jnp.float32)  # (128,4)
    b4 = jnp.asarray(params[9]).astype(jnp.float32)                    # (1, 1)
    return (w0t, wht, w4c, bht, b4)


def _choose_tile_m(n, *, align=256, max_tile=2048):
    """Batch tile: >=2 grid blocks once n > align (feeds both v7x TCs through
    the 'parallel' axis) and up to `max_tile` rows to amortize the ~0.35us
    per-grid-step overhead.  On v5e, align=128 is sufficient (4x128 MXU)."""
    if n <= align:
        return align
    half_blocks = pl.cdiv(pl.cdiv(n, 2), align)
    return int(min(max_tile, half_blocks * align))


@functools.partial(jax.jit, static_argnames=("tile_m", "bf16_tanh"))
def dnn_forward(x, packed, tile_m=None, bf16_tanh=True):
    """x: [N, 2] f32; packed: output of pack_params.

    Returns [N, 1] f32 (same semantics as the PyTorch DNN.forward).
    bf16_tanh: run tanh in bf16 when the matmuls are bf16 (v6e/v7x); set False
    on v5e (no bf16 EUP/VPU).
    """
    N, din = x.shape
    assert din == DIN
    w0t, wht, w4c, bht, b4 = packed
    H = HIDDEN

    matmul_dtype = wht.dtype
    use_bf16 = matmul_dtype == jnp.bfloat16
    tanh_dtype = jnp.bfloat16 if (use_bf16 and bf16_tanh) else jnp.float32

    if tile_m is None:
        tile_m = _choose_tile_m(N)
    n_blocks = pl.cdiv(N, tile_m)
    n_pad = n_blocks * tile_m

    # Feed x feature-major so the per-tile input block (2, tile_m) is lane-dense.
    x_t = x.T                                                   # (2, N)
    if n_pad != N:
        x_t = jnp.pad(x_t, ((0, 0), (0, n_pad - N)))

    flops = n_pad * (2 * DIN * H + 3 * 2 * H * H + 2 * H)
    transcendentals = n_pad * 4 * H
    bytes_accessed = (n_pad * (DIN + 1) * 4
                      + int(w0t.size) * 4 + int(wht.size) * wht.dtype.itemsize
                      + int(w4c.size) * 4 + int(bht.size) * 4 + 4)

    kernel = functools.partial(mlp_kernel,
                               matmul_dtype=matmul_dtype,
                               tanh_dtype=tanh_dtype)

    out_row = pl.pallas_call(
        kernel,
        out_shape=jax.ShapeDtypeStruct((1, n_pad), jnp.float32),
        grid_spec=pltpu.PrefetchScalarGridSpec(
            num_scalar_prefetch=0,
            grid=(n_blocks,),
            in_specs=[
                pl.BlockSpec((DIN, tile_m), lambda i: (0, i)),      # x^T tile
                pl.BlockSpec((H, DIN), lambda i: (0, 0)),           # W0^T
                pl.BlockSpec((3, H, H), lambda i: (0, 0, 0)),       # W1..3^T
                pl.BlockSpec((H, 1), lambda i: (0, 0)),             # W4 column
                pl.BlockSpec((H, 4), lambda i: (0, 0)),             # b0..3 columns
                pl.BlockSpec(memory_space=pltpu.MemorySpace.SMEM),  # b4 scalar
            ],
            out_specs=pl.BlockSpec((1, tile_m), lambda i: (0, i)),
        ),
        compiler_params=pltpu.CompilerParams(
            dimension_semantics=("parallel",)),
        cost_estimate=pl.CostEstimate(
            flops=flops,
            transcendentals=transcendentals,
            bytes_accessed=bytes_accessed),
    )(x_t, w0t, wht, w4c, bht, b4)

    # Lane-dense (1, n_pad) row -> (N, 1) column expected by the PyTorch module.
    return out_row[0, :N][:, None]


def init_params(key, layers):
    """Deterministic init mimicking torch.nn.Linear (uniform +-1/sqrt(fan_in)).

    Weights stored as (in, out); biases as (1, out).
    """
    params = []
    for i in range(len(layers) - 1):
        fan_in, fan_out = layers[i], layers[i + 1]
        key, kw, kb = jax.random.split(key, 3)
        bound = 1.0 / jnp.sqrt(fan_in)
        w = jax.random.uniform(kw, (fan_in, fan_out), jnp.float32, -bound, bound)
        b = jax.random.uniform(kb, (1, fan_out), jnp.float32, -bound, bound)
        params.extend([w, b])
    return params


def reference_forward(x, params):
    h = x
    n_layers = len(params) // 2
    for i in range(n_layers):
        w, b = params[2 * i], params[2 * i + 1]
        h = h @ w + b
        if i < n_layers - 1:
            h = jnp.tanh(h)
    return h


if __name__ == "__main__":
    # TODO(synk): the original script loads collocation points from AC.mat via
    # scipy.io.loadmat; synthetic inputs are generated here instead.
    key = jax.random.PRNGKey(0)
    key, kx1, kx2 = jax.random.split(key, 3)
    params = init_params(key, LAYERS)

    # Pack parameters once (outside the per-call path).
    packed_f32 = pack_params(params, matmul_dtype=jnp.float32)   # exact mode
    packed_bf16 = pack_params(params, matmul_dtype=jnp.bfloat16)  # fast mode

    # Small batch of collocation points (single 256-row tile).
    N1 = 16
    x1 = jax.random.normal(kx1, (N1, LAYERS[0]), jnp.float32)
    ref1 = reference_forward(x1, params)

    out1_f32 = jax.block_until_ready(dnn_forward(x1, packed_f32, tile_m=256))
    assert out1_f32.shape == (N1, LAYERS[-1])
    assert jnp.allclose(out1_f32, ref1, atol=1e-5, rtol=1e-5), \
        "f32 mismatch vs reference (N=16)"

    out1_bf16 = jax.block_until_ready(dnn_forward(x1, packed_bf16))
    assert out1_bf16.shape == (N1, LAYERS[-1])
    assert jnp.allclose(out1_bf16, ref1, atol=5e-2, rtol=5e-2), \
        "bf16 mismatch vs reference (N=16)"

    # Larger, non-multiple batch: exercises padding + multi-block (megacore) path.
    N2 = 300
    x2 = jax.random.normal(kx2, (N2, LAYERS[0]), jnp.float32)
    ref2 = reference_forward(x2, params)

    out2_f32 = jax.block_until_ready(dnn_forward(x2, packed_f32))
    assert out2_f32.shape == (N2, LAYERS[-1])
    assert jnp.allclose(out2_f32, ref2, atol=1e-5, rtol=1e-5), \
        "f32 mismatch vs reference (N=300)"

    out2_bf16 = jax.block_until_ready(dnn_forward(x2, packed_bf16, bf16_tanh=True))
    assert out2_bf16.shape == (N2, LAYERS[-1])
    assert jnp.allclose(out2_bf16, ref2, atol=5e-2, rtol=5e-2), \
        "bf16 mismatch vs reference (N=300)"

    print("KERNEL_OK")
</pallas_src>

<mosaic_0001>
module attributes {stable_mosaic.version = 11 : i64} {
  func.func @mlp_kernel(%arg0: i32, %arg1: memref<2x256xf32, #tpu.memory_space<vmem>>, %arg2: memref<128x2xf32, #tpu.memory_space<vmem>>, %arg3: memref<3x128x128xf32, #tpu.memory_space<vmem>>, %arg4: memref<128x1xf32, #tpu.memory_space<vmem>>, %arg5: memref<128x4xf32, #tpu.memory_space<vmem>>, %arg6: memref<1x1xf32, #tpu.memory_space<smem>>, %arg7: memref<1x256xf32, #tpu.memory_space<vmem>>) attributes {dimension_semantics = [#tpu.dimension_semantics<parallel>], iteration_bounds = array<i64: 1>, scalar_prefetch = 0 : i64, scratch_operands = 0 : i64, tpu.core_type = #tpu.core_type<tc>, window_params = [{transform_indices = @transform_0, window_bounds = array<i64: 2, 256>}, {pipeline_mode = #tpu.pipeline_mode<synchronous>, transform_indices = @transform_1, window_bounds = array<i64: 128, 2>}, {pipeline_mode = #tpu.pipeline_mode<synchronous>, transform_indices = @transform_2, window_bounds = array<i64: 3, 128, 128>}, {pipeline_mode = #tpu.pipeline_mode<synchronous>, transform_indices = @transform_3, window_bounds = array<i64: 128, 1>}, {pipeline_mode = #tpu.pipeline_mode<synchronous>, transform_indices = @transform_4, window_bounds = array<i64: 128, 4>}, {transform_indices = @transform_5, window_bounds = array<i64: 1, 1>}, {transform_indices = @transform_6, window_bounds = array<i64: 1, 256>}]} {
    %c0 = arith.constant 0 : index
    %c0_0 = arith.constant 0 : index
    %0 = vector.load %arg1[%c0, %c0_0] : memref<2x256xf32, #tpu.memory_space<vmem>>, vector<2x256xf32>
    %c0_1 = arith.constant 0 : index
    %c0_2 = arith.constant 0 : index
    %1 = vector.load %arg2[%c0_1, %c0_2] : memref<128x2xf32, #tpu.memory_space<vmem>>, vector<128x2xf32>
    %2 = vector.extract_strided_slice %1 {offsets = [0, 0], sizes = [128, 1], strides = [1, 1]} : vector<128x2xf32> to vector<128x1xf32>
    %3 = vector.extract_strided_slice %0 {offsets = [0, 0], sizes = [1, 256], strides = [1, 1]} : vector<2x256xf32> to vector<1x256xf32>
    %4 = vector.broadcast %2 : vector<128x1xf32> to vector<128x256xf32>
    %5 = vector.broadcast %3 : vector<1x256xf32> to vector<128x256xf32>
    %6 = arith.mulf %4, %5 : vector<128x256xf32>
    %7 = vector.extract_strided_slice %1 {offsets = [0, 1], sizes = [128, 1], strides = [1, 1]} : vector<128x2xf32> to vector<128x1xf32>
    %8 = vector.extract_strided_slice %0 {offsets = [1, 0], sizes = [1, 256], strides = [1, 1]} : vector<2x256xf32> to vector<1x256xf32>
    %9 = vector.broadcast %7 : vector<128x1xf32> to vector<128x256xf32>
    %10 = vector.broadcast %8 : vector<1x256xf32> to vector<128x256xf32>
    %11 = arith.mulf %9, %10 : vector<128x256xf32>
    %12 = arith.addf %6, %11 : vector<128x256xf32>
    %c0_3 = arith.constant 0 : index
    %c0_4 = arith.constant 0 : index
    %13 = vector.load %arg5[%c0_3, %c0_4] : memref<128x4xf32, #tpu.memory_space<vmem>>, vector<128x1xf32>
    %14 = vector.broadcast %13 : vector<128x1xf32> to vector<128x256xf32>
    %15 = arith.addf %12, %14 : vector<128x256xf32>
    %16 = math.tanh %15 : vector<128x256xf32>
    %c0_5 = arith.constant 0 : index
    %c0_6 = arith.constant 0 : index
    %c0_7 = arith.constant 0 : index
    %17 = vector.load %arg3[%c0_5, %c0_6, %c0_7] : memref<3x128x128xf32, #tpu.memory_space<vmem>>, vector<1x128x128xf32>
    %18 = vector.shape_cast %17 : vector<1x128x128xf32> to vector<128x128xf32>
    %cst = arith.constant dense<0.000000e+00> : vector<128x256xf32>
    %19 = tpu.matmul %18, %16, %cst {dimension_numbers = #tpu.dot_dimension_numbers<[1], [0], [0], [1], [0, 0, 1, 1], [], []>} : vector<128x128xf32>, vector<128x256xf32>, vector<128x256xf32> -> vector<128x256xf32>
    %c0_8 = arith.constant 0 : index
    %c1 = arith.constant 1 : index
    %20 = vector.load %arg5[%c0_8, %c1] : memref<128x4xf32, #tpu.memory_space<vmem>>, vector<128x1xf32>
    %21 = vector.broadcast %20 : vector<128x1xf32> to vector<128x256xf32>
    %22 = arith.addf %19, %21 : vector<128x256xf32>
    %23 = math.tanh %22 : vector<128x256xf32>
    %c1_9 = arith.constant 1 : index
    %c0_10 = arith.constant 0 : index
    %c0_11 = arith.constant 0 : index
    %24 = vector.load %arg3[%c1_9, %c0_10, %c0_11] : memref<3x128x128xf32, #tpu.memory_space<vmem>>, vector<1x128x128xf32>
    %25 = vector.shape_cast %24 : vector<1x128x128xf32> to vector<128x128xf32>
    %cst_12 = arith.constant dense<0.000000e+00> : vector<128x256xf32>
    %26 = tpu.matmul %25, %23, %cst_12 {dimension_numbers = #tpu.dot_dimension_numbers<[1], [0], [0], [1], [0, 0, 1, 1], [], []>} : vector<128x128xf32>, vector<128x256xf32>, vector<128x256xf32> -> vector<128x256xf32>
    %c0_13 = arith.constant 0 : index
    %c2 = arith.constant 2 : index
    %27 = vector.load %arg5[%c0_13, %c2] : memref<128x4xf32, #tpu.memory_space<vmem>>, vector<128x1xf32>
    %28 = vector.broadcast %27 : vector<128x1xf32> to vector<128x256xf32>
    %29 = arith.addf %26, %28 : vector<128x256xf32>
    %30 = math.tanh %29 : vector<128x256xf32>
    %c2_14 = arith.constant 2 : index
    %c0_15 = arith.constant 0 : index
    %c0_16 = arith.constant 0 : index
    %31 = vector.load %arg3[%c2_14, %c0_15, %c0_16] : memref<3x128x128xf32, #tpu.memory_space<vmem>>, vector<1x128x128xf32>
    %32 = vector.shape_cast %31 : vector<1x128x128xf32> to vector<128x128xf32>
    %cst_17 = arith.constant dense<0.000000e+00> : vector<128x256xf32>
    %33 = tpu.matmul %32, %30, %cst_17 {dimension_numbers = #tpu.dot_dimension_numbers<[1], [0], [0], [1], [0, 0, 1, 1], [], []>} : vector<128x128xf32>, vector<128x256xf32>, vector<128x256xf32> -> vector<128x256xf32>
    %c0_18 = arith.constant 0 : index
    %c3 = arith.constant 3 : index
    %34 = vector.load %arg5[%c0_18, %c3] : memref<128x4xf32, #tpu.memory_space<vmem>>, vector<128x1xf32>
    %35 = vector.broadcast %34 : vector<128x1xf32> to vector<128x256xf32>
    %36 = arith.addf %33, %35 : vector<128x256xf32>
    %37 = math.tanh %36 : vector<128x256xf32>
    %c0_19 = arith.constant 0 : index
    %c0_20 = arith.constant 0 : index
    %38 = vector.load %arg4[%c0_19, %c0_20] : memref<128x1xf32, #tpu.memory_space<vmem>>, vector<128x1xf32>
    %39 = vector.broadcast %38 : vector<128x1xf32> to vector<128x256xf32>
    %40 = arith.mulf %37, %39 : vector<128x256xf32>
    %cst_21 = arith.constant dense<0.000000e+00> : vector<256xf32>
    %41 = vector.multi_reduction <add>, %40, %cst_21 [0] : vector<128x256xf32> to vector<256xf32>
    %42 = vector.shape_cast %41 : vector<256xf32> to vector<1x256xf32>
    %c0_22 = arith.constant 0 : index
    %c0_23 = arith.constant 0 : index
    %43 = memref.load %arg6[%c0_22, %c0_23] : memref<1x1xf32, #tpu.memory_space<smem>>
    %44 = vector.broadcast %43 : f32 to vector<1x256xf32>
    %45 = arith.addf %42, %44 : vector<1x256xf32>
    %c0_24 = arith.constant 0 : index
    %c0_25 = arith.constant 0 : index
    %46 = vector.load %arg7[%c0_24, %c0_25] : memref<1x256xf32, #tpu.memory_space<vmem>>, vector<1x256xf32>
    tpu.vector_store %arg7[%c0_24, %c0_25], %45 {strides = array<i32>} : memref<1x256xf32, #tpu.memory_space<vmem>>, vector<1x256xf32>,
    return
  }
  func.func @transform_0(%arg0: i32) -> (i32, i32) {
    %c0_i32 = arith.constant 0 : i32
    %c0_i32_0 = arith.constant 0 : i32
    return %c0_i32, %arg0 : i32, i32
  }
  func.func @transform_1(%arg0: i32) -> (i32, i32) {
    %c0_i32 = arith.constant 0 : i32
    %c0_i32_0 = arith.constant 0 : i32
    %c0_i32_1 = arith.constant 0 : i32
    return %c0_i32, %c0_i32_0 : i32, i32
  }
  func.func @transform_2(%arg0: i32) -> (i32, i32, i32) {
    %c0_i32 = arith.constant 0 : i32
    %c0_i32_0 = arith.constant 0 : i32
    %c0_i32_1 = arith.constant 0 : i32
    %c0_i32_2 = arith.constant 0 : i32
    return %c0_i32, %c0_i32_0, %c0_i32_1 : i32, i32, i32
  }
  func.func @transform_3(%arg0: i32) -> (i32, i32) {
    %c0_i32 = arith.constant 0 : i32
    %c0_i32_0 = arith.constant 0 : i32
    %c0_i32_1 = arith.constant 0 : i32
    return %c0_i32, %c0_i32_0 : i32, i32
  }
  func.func @transform_4(%arg0: i32) -> (i32, i32) {
    %c0_i32 = arith.constant 0 : i32
    %c0_i32_0 = arith.constant 0 : i32
    %c0_i32_1 = arith.constant 0 : i32
    return %c0_i32, %c0_i32_0 : i32, i32
  }
  func.func @transform_5(%arg0: i32) -> (i32, i32) {
    %c0_i32 = arith.constant 0 : i32
    %c0_i32_0 = arith.constant 0 : i32
    %c0_i32_1 = arith.constant 0 : i32
    return %c0_i32, %c0_i32_0 : i32, i32
  }
  func.func @transform_6(%arg0: i32) -> (i32, i32) {
    %c0_i32 = arith.constant 0 : i32
    %c0_i32_0 = arith.constant 0 : i32
    return %c0_i32, %arg0 : i32, i32
  }
}

</mosaic_0001>

<llo_original>
// kernel: dnn_forward.1
$region0: #{dnn_forward.1}
  #allocation0 [shape = 'u32[]', space=smem, size = 0x4, offset = 0x4, fixed_abs, tag = 'smem constant byte address 0x4 - core index']
  #allocation1 [shape = 'u32[144,128]{1,0:T(1,128)}', space=vmem, size = 0x12000, scoped, tag = 'internal scratch']
  #allocation2 [shape = 'f32[1,1]{1,0:T(1,128)S(6)}', space=smem, size = 0x200, scoped, tag = 'scoped memory for dnn_forward.1']
  %s0 = inlined_call_operand.vmem [shape: f32[2,256], index: 0, kind: input, shape index: {}]
  %s1 = inlined_call_operand.vmem [shape: f32[128,2], index: 1, kind: input, shape index: {}]
  %s2 = inlined_call_operand.vmem [shape: f32[3,128,128], index: 2, kind: input, shape index: {}]
  %s3 = inlined_call_operand.vmem [shape: f32[128,1], index: 3, kind: input, shape index: {}]
  %s4 = inlined_call_operand.vmem [shape: f32[128,4], index: 4, kind: input, shape index: {}]
  %s5 = inlined_call_operand.<no memory space> [shape: f32[1,1], index: 5, kind: input, shape index: {}]
  %s6 = inlined_call_operand.vmem [shape: f32[1,256], index: 6, kind: output, shape index: {}]
  %s7 = sld [smem:[#allocation0]]
  $region34: #{dnn_forward.1} parent=0
    _
  %s9 = ssub.s32 1, %s7
  %s10 = scalar_select 0, %s9, %s7
  %11 = sst [smem:[#allocation2]] %s5
  // Predicated region
  $region2: #{dnn_forward.1} parent=0 // pred_check
    _
  $region3: #{dnn_forward.1} parent=0 // pred_check_branch
    %13 = sbr.rel (0) target = $region5
  $region4: #{dnn_forward.1} parent=0 // pred_region
    _
  $region5: #{dnn_forward.1} parent=0 // pred_fallthru
    _
  // Predicated region
  $region6: #{dnn_forward.1} parent=0 // pred_check
    _
  $region7: #{dnn_forward.1} parent=0 // pred_check_branch
    %15 = sbr.rel (0) target = $region9
  $region8: #{dnn_forward.1} parent=0 // pred_region
    _
  $region9: #{dnn_forward.1} parent=0 // pred_fallthru
    _
  // Predicated region
  $region10: #{dnn_forward.1} parent=0 // pred_check
    _
  $region11: #{dnn_forward.1} parent=0 // pred_check_branch
    %17 = sbr.rel (0) target = $region13
  $region12: #{dnn_forward.1} parent=0 // pred_region
    _
  $region13: #{dnn_forward.1} parent=0 // pred_fallthru
    _
  // Predicated region
  $region14: #{dnn_forward.1} parent=0 // pred_check
    _
  $region15: #{dnn_forward.1} parent=0 // pred_check_branch
    %19 = sbr.rel (0) target = $region17
  $region16: #{dnn_forward.1} parent=0 // pred_region
    _
  $region17: #{dnn_forward.1} parent=0 // pred_fallthru
    _
  // Predicated region
  $region18: #{dnn_forward.1} parent=0 // pred_check
    _
  $region19: #{dnn_forward.1} parent=0 // pred_check_branch
    %21 = sbr.rel (0) target = $region21
  $region20: #{dnn_forward.1} parent=0 // pred_region
    _
  $region21: #{dnn_forward.1} parent=0 // pred_fallthru
    _
  // Predicated region
  $region22: #{dnn_forward.1} parent=0 // pred_check
    _
  $region23: #{dnn_forward.1} parent=0 // pred_check_branch
    %23 = sbr.rel (0) target = $region25
  $region24: #{dnn_forward.1} parent=0 // pred_region
    _
  $region25: #{dnn_forward.1} parent=0 // pred_fallthru
    _
  %v24 = vld [vmem:[%s0] sm:$0xf]
  %v25 = vld [vmem:[%s1] sm:$0xff]
  %v26 = vld [vmem:[%s1 + $0x8] sm:$0xff]
  %v27 = vld [vmem:[%s1 + $0x10] sm:$0xff]
  %v28 = vld [vmem:[%s1 + $0x18] sm:$0xff]
  %v29 = vld [vmem:[%s1 + $0x20] sm:$0xff]
  %v30 = vld [vmem:[%s1 + $0x28] sm:$0xff]
  %v31 = vld [vmem:[%s1 + $0x30] sm:$0xff]
  %v32 = vld [vmem:[%s1 + $0x38] sm:$0xff]
  %v33 = vld [vmem:[%s1 + $0x40] sm:$0xff]
  %v34 = vld [vmem:[%s1 + $0x48] sm:$0xff]
  %v35 = vld [vmem:[%s1 + $0x50] sm:$0xff]
  %v36 = vld [vmem:[%s1 + $0x58] sm:$0xff]
  %v37 = vld [vmem:[%s1 + $0x60] sm:$0xff]
  %v38 = vld [vmem:[%s1 + $0x68] sm:$0xff]
  %v39 = vld [vmem:[%s1 + $0x70] sm:$0xff]
  %v40 = vld [vmem:[%s1 + $0x78] sm:$0xff]
  %42 = vset.pattern.permute.xlu0 0
  %43 = vperm.xlu0 %42, %v25
  %v44 = vpop.permute.xlu0 %43
  %47 = vset.pattern.permute.xlu0 0
  %48 = vperm.xlu0 %47, %v26
  %v49 = vpop.permute.xlu0 %48
  %52 = vset.pattern.permute.xlu0 0
  %53 = vperm.xlu0 %52, %v27
  %v54 = vpop.permute.xlu0 %53
  %57 = vset.pattern.permute.xlu0 0
  %58 = vperm.xlu0 %57, %v28
  %v59 = vpop.permute.xlu0 %58
  %62 = vset.pattern.permute.xlu0 0
  %63 = vperm.xlu0 %62, %v29
  %v64 = vpop.permute.xlu0 %63
  %67 = vset.pattern.permute.xlu0 0
  %68 = vperm.xlu0 %67, %v30
  %v69 = vpop.permute.xlu0 %68
  %72 = vset.pattern.permute.xlu0 0
  %73 = vperm.xlu0 %72, %v31
  %v74 = vpop.permute.xlu0 %73
  %77 = vset.pattern.permute.xlu0 0
  %78 = vperm.xlu0 %77, %v32
  %v79 = vpop.permute.xlu0 %78
  %82 = vset.pattern.permute.xlu0 0
  %83 = vperm.xlu0 %82, %v33
  %v84 = vpop.permute.xlu0 %83
  %87 = vset.pattern.permute.xlu0 0
  %88 = vperm.xlu0 %87, %v34
  %v89 = vpop.permute.xlu0 %88
  %92 = vset.pattern.permute.xlu0 0
  %93 = vperm.xlu0 %92, %v35
  %v94 = vpop.permute.xlu0 %93
  %97 = vset.pattern.permute.xlu0 0
  %98 = vperm.xlu0 %97, %v36
  %v99 = vpop.permute.xlu0 %98
  %102 = vset.pattern.permute.xlu0 0
  %103 = vperm.xlu0 %102, %v37
  %v104 = vpop.permute.xlu0 %103
  %107 = vset.pattern.permute.xlu0 0
  %108 = vperm.xlu0 %107, %v38
  %v109 = vpop.permute.xlu0 %108
  %112 = vset.pattern.permute.xlu0 0
  %113 = vperm.xlu0 %112, %v39
  %v114 = vpop.permute.xlu0 %113
  %117 = vset.pattern.permute.xlu0 0
  %118 = vperm.xlu0 %117, %v40
  %v119 = vpop.permute.xlu0 %118
  %v122 = vlaneseq
  %v123 = vshrl.u32 %v122, 7
  %v124 = vsub.s32 0, %v123
  %v125 = vrot.slane %v24, %v124
  %v126 = vlaneseq
  %v127 = vshrl.u32 %v126, 7
  %v128 = vsub.s32 2, %v127
  %v129 = vrot.slane %v24, %v128
  %v132 = vlaneseq
  %v133 = vshrl.u32 %v132, 7
  %v134 = vsub.s32 0, %v133
  %v135 = vrot.slane %v125, %v134
  %v136 = vlaneseq
  %v137 = vshrl.u32 %v136, 7
  %v138 = vsub.s32 0, %v137
  %v139 = vrot.slane %v129, %v138
  %v140 = vmul.f32 %v44, %v135
  %v141 = vmul.f32 %v44, %v139
  %v142 = vmul.f32 %v49, %v135
  %v143 = vmul.f32 %v49, %v139
  %v144 = vmul.f32 %v54, %v135
  %v145 = vmul.f32 %v54, %v139
  %v146 = vmul.f32 %v59, %v135
  %v147 = vmul.f32 %v59, %v139
  %v148 = vmul.f32 %v64, %v135
  %v149 = vmul.f32 %v64, %v139
  %v150 = vmul.f32 %v69, %v135
  %v151 = vmul.f32 %v69, %v139
  %v152 = vmul.f32 %v74, %v135
  %v153 = vmul.f32 %v74, %v139
  %v154 = vmul.f32 %v79, %v135
  %v155 = vmul.f32 %v79, %v139
  %v156 = vmul.f32 %v84, %v135
  %v157 = vmul.f32 %v84, %v139
  %v158 = vmul.f32 %v89, %v135
  %v159 = vmul.f32 %v89, %v139
  %v160 = vmul.f32 %v94, %v135
  %v161 = vmul.f32 %v94, %v139
  %v162 = vmul.f32 %v99, %v135
  %v163 = vmul.f32 %v99, %v139
  %v164 = vmul.f32 %v104, %v135
  %v165 = vmul.f32 %v104, %v139
  %v166 = vmul.f32 %v109, %v135
  %v167 = vmul.f32 %v109, %v139
  %v168 = vmul.f32 %v114, %v135
  %v169 = vmul.f32 %v114, %v139
  %v170 = vmul.f32 %v119, %v135
  %v171 = vmul.f32 %v119, %v139
  %172 = vset.pattern.permute.xlu0 1
  %173 = vperm.xlu0 %172, %v25
  %v174 = vpop.permute.xlu0 %173
  %176 = vset.pattern.permute.xlu0 1
  %177 = vperm.xlu0 %176, %v26
  %v178 = vpop.permute.xlu0 %177
  %180 = vset.pattern.permute.xlu0 1
  %181 = vperm.xlu0 %180, %v27
  %v182 = vpop.permute.xlu0 %181
  %184 = vset.pattern.permute.xlu0 1
  %185 = vperm.xlu0 %184, %v28
  %v186 = vpop.permute.xlu0 %185
  %188 = vset.pattern.permute.xlu0 1
  %189 = vperm.xlu0 %188, %v29
  %v190 = vpop.permute.xlu0 %189
  %192 = vset.pattern.permute.xlu0 1
  %193 = vperm.xlu0 %192, %v30
  %v194 = vpop.permute.xlu0 %193
  %196 = vset.pattern.permute.xlu0 1
  %197 = vperm.xlu0 %196, %v31
  %v198 = vpop.permute.xlu0 %197
  %200 = vset.pattern.permute.xlu0 1
  %201 = vperm.xlu0 %200, %v32
  %v202 = vpop.permute.xlu0 %201
  %204 = vset.pattern.permute.xlu0 1
  %205 = vperm.xlu0 %204, %v33
  %v206 = vpop.permute.xlu0 %205
  %208 = vset.pattern.permute.xlu0 1
  %209 = vperm.xlu0 %208, %v34
  %v210 = vpop.permute.xlu0 %209
  %212 = vset.pattern.permute.xlu0 1
  %213 = vperm.xlu0 %212, %v35
  %v214 = vpop.permute.xlu0 %213
  %216 = vset.pattern.permute.xlu0 1
  %217 = vperm.xlu0 %216, %v36
  %v218 = vpop.permute.xlu0 %217
  %220 = vset.pattern.permute.xlu0 1
  %221 = vperm.xlu0 %220, %v37
  %v222 = vpop.permute.xlu0 %221
  %224 = vset.pattern.permute.xlu0 1
  %225 = vperm.xlu0 %224, %v38
  %v226 = vpop.permute.xlu0 %225
  %228 = vset.pattern.permute.xlu0 1
  %229 = vperm.xlu0 %228, %v39
  %v230 = vpop.permute.xlu0 %229
  %232 = vset.pattern.permute.xlu0 1
  %233 = vperm.xlu0 %232, %v40
  %v234 = vpop.permute.xlu0 %233
  %v236 = vlaneseq
  %v237 = vshrl.u32 %v236, 7
  %v238 = vsub.s32 1, %v237
  %v239 = vrot.slane %v24, %v238
  %v240 = vlaneseq
  %v241 = vshrl.u32 %v240, 7
  %v242 = vsub.s32 3, %v241
  %v243 = vrot.slane %v24, %v242
  %v246 = vlaneseq
  %v247 = vshrl.u32 %v246, 7
  %v248 = vsub.s32 1, %v247
  %v249 = vrot.slane %v239, %v248
  %v250 = vlaneseq
  %v251 = vshrl.u32 %v250, 7
  %v252 = vsub.s32 1, %v251
  %v253 = vrot.slane %v243, %v252
  %v254 = vmul.f32 %v174, %v249
  %v255 = vmul.f32 %v174, %v253
  %v256 = vmul.f32 %v178, %v249
  %v257 = vmul.f32 %v178, %v253
  %v258 = vmul.f32 %v182, %v249
  %v259 = vmul.f32 %v182, %v253
  %v260 = vmul.f32 %v186, %v249
  %v261 = vmul.f32 %v186, %v253
  %v262 = vmul.f32 %v190, %v249
  %v263 = vmul.f32 %v190, %v253
  %v264 = vmul.f32 %v194, %v249
  %v265 = vmul.f32 %v194, %v253
  %v266 = vmul.f32 %v198, %v249
  %v267 = vmul.f32 %v198, %v253
  %v268 = vmul.f32 %v202, %v249
  %v269 = vmul.f32 %v202, %v253
  %v270 = vmul.f32 %v206, %v249
  %v271 = vmul.f32 %v206, %v253
  %v272 = vmul.f32 %v210, %v249
  %v273 = vmul.f32 %v210, %v253
  %v274 = vmul.f32 %v214, %v249
  %v275 = vmul.f32 %v214, %v253
  %v276 = vmul.f32 %v218, %v249
  %v277 = vmul.f32 %v218, %v253
  %v278 = vmul.f32 %v222, %v249
  %v279 = vmul.f32 %v222, %v253
  %v280 = vmul.f32 %v226, %v249
  %v281 = vmul.f32 %v226, %v253
  %v282 = vmul.f32 %v230, %v249
  %v283 = vmul.f32 %v230, %v253
  %v284 = vmul.f32 %v234, %v249
  %v285 = vmul.f32 %v234, %v253
  %v286 = vadd.f32 %v140, %v254
  %v287 = vadd.f32 %v141, %v255
  %v288 = vadd.f32 %v142, %v256
  %v289 = vadd.f32 %v143, %v257
  %v290 = vadd.f32 %v144, %v258
  %v291 = vadd.f32 %v145, %v259
  %v292 = vadd.f32 %v146, %v260
  %v293 = vadd.f32 %v147, %v261
  %v294 = vadd.f32 %v148, %v262
  %v295 = vadd.f32 %v149, %v263
  %v296 = vadd.f32 %v150, %v264
  %v297 = vadd.f32 %v151, %v265
  %v298 = vadd.f32 %v152, %v266
  %v299 = vadd.f32 %v153, %v267
  %v300 = vadd.f32 %v154, %v268
  %v301 = vadd.f32 %v155, %v269
  %v302 = vadd.f32 %v156, %v270
  %v303 = vadd.f32 %v157, %v271
  %v304 = vadd.f32 %v158, %v272
  %v305 = vadd.f32 %v159, %v273
  %v306 = vadd.f32 %v160, %v274
  %v307 = vadd.f32 %v161, %v275
  %v308 = vadd.f32 %v162, %v276
  %v309 = vadd.f32 %v163, %v277
  %v310 = vadd.f32 %v164, %v278
  %v311 = vadd.f32 %v165, %v279
  %v312 = vadd.f32 %v166, %v280
  %v313 = vadd.f32 %v167, %v281
  %v314 = vadd.f32 %v168, %v282
  %v315 = vadd.f32 %v169, %v283
  %v316 = vadd.f32 %v170, %v284
  %v317 = vadd.f32 %v171, %v285
  %v318 = vld [vmem:[%s4] sm:$0xff]
  %v319 = vld [vmem:[%s4 + $0x8] sm:$0xff]
  %v320 = vld [vmem:[%s4 + $0x10] sm:$0xff]
  %v321 = vld [vmem:[%s4 + $0x18] sm:$0xff]
  %v322 = vld [vmem:[%s4 + $0x20] sm:$0xff]
  %v323 = vld [vmem:[%s4 + $0x28] sm:$0xff]
  %v324 = vld [vmem:[%s4 + $0x30] sm:$0xff]
  %v325 = vld [vmem:[%s4 + $0x38] sm:$0xff]
  %v326 = vld [vmem:[%s4 + $0x40] sm:$0xff]
  %v327 = vld [vmem:[%s4 + $0x48] sm:$0xff]
  %v328 = vld [vmem:[%s4 + $0x50] sm:$0xff]
  %v329 = vld [vmem:[%s4 + $0x58] sm:$0xff]
  %v330 = vld [vmem:[%s4 + $0x60] sm:$0xff]
  %v331 = vld [vmem:[%s4 + $0x68] sm:$0xff]
  %v332 = vld [vmem:[%s4 + $0x70] sm:$0xff]
  %v333 = vld [vmem:[%s4 + $0x78] sm:$0xff]
  %335 = vset.pattern.permute.xlu0 0
  %336 = vperm.xlu0 %335, %v318
  %v337 = vpop.permute.xlu0 %336
  %340 = vset.pattern.permute.xlu0 0
  %341 = vperm.xlu0 %340, %v319
  %v342 = vpop.permute.xlu0 %341
  %345 = vset.pattern.permute.xlu0 0
  %346 = vperm.xlu0 %345, %v320
  %v347 = vpop.permute.xlu0 %346
  %350 = vset.pattern.permute.xlu0 0
  %351 = vperm.xlu0 %350, %v321
  %v352 = vpop.permute.xlu0 %351
  %355 = vset.pattern.permute.xlu0 0
  %356 = vperm.xlu0 %355, %v322
  %v357 = vpop.permute.xlu0 %356
  %360 = vset.pattern.permute.xlu0 0
  %361 = vperm.xlu0 %360, %v323
  %v362 = vpop.permute.xlu0 %361
  %365 = vset.pattern.permute.xlu0 0
  %366 = vperm.xlu0 %365, %v324
  %v367 = vpop.permute.xlu0 %366
  %370 = vset.pattern.permute.xlu0 0
  %371 = vperm.xlu0 %370, %v325
  %v372 = vpop.permute.xlu0 %371
  %375 = vset.pattern.permute.xlu0 0
  %376 = vperm.xlu0 %375, %v326
  %v377 = vpop.permute.xlu0 %376
  %380 = vset.pattern.permute.xlu0 0
  %381 = vperm.xlu0 %380, %v327
  %v382 = vpop.permute.xlu0 %381
  %385 = vset.pattern.permute.xlu0 0
  %386 = vperm.xlu0 %385, %v328
  %v387 = vpop.permute.xlu0 %386
  %390 = vset.pattern.permute.xlu0 0
  %391 = vperm.xlu0 %390, %v329
  %v392 = vpop.permute.xlu0 %391
  %395 = vset.pattern.permute.xlu0 0
  %396 = vperm.xlu0 %395, %v330
  %v397 = vpop.permute.xlu0 %396
  %400 = vset.pattern.permute.xlu0 0
  %401 = vperm.xlu0 %400, %v331
  %v402 = vpop.permute.xlu0 %401
  %405 = vset.pattern.permute.xlu0 0
  %406 = vperm.xlu0 %405, %v332
  %v407 = vpop.permute.xlu0 %406
  %410 = vset.pattern.permute.xlu0 0
  %411 = vperm.xlu0 %410, %v333
  %v412 = vpop.permute.xlu0 %411
  %v414 = vadd.f32 %v286, %v337
  %v415 = vadd.f32 %v287, %v337
  %v416 = vadd.f32 %v288, %v342
  %v417 = vadd.f32 %v289, %v342
  %v418 = vadd.f32 %v290, %v347
  %v419 = vadd.f32 %v291, %v347
  %v420 = vadd.f32 %v292, %v352
  %v421 = vadd.f32 %v293, %v352
  %v422 = vadd.f32 %v294, %v357
  %v423 = vadd.f32 %v295, %v357
  %v424 = vadd.f32 %v296, %v362
  %v425 = vadd.f32 %v297, %v362
  %v426 = vadd.f32 %v298, %v367
  %v427 = vadd.f32 %v299, %v367
  %v428 = vadd.f32 %v300, %v372
  %v429 = vadd.f32 %v301, %v372
  %v430 = vadd.f32 %v302, %v377
  %v431 = vadd.f32 %v303, %v377
  %v432 = vadd.f32 %v304, %v382
  %v433 = vadd.f32 %v305, %v382
  %v434 = vadd.f32 %v306, %v387
  %v435 = vadd.f32 %v307, %v387
  %v436 = vadd.f32 %v308, %v392
  %v437 = vadd.f32 %v309, %v392
  %v438 = vadd.f32 %v310, %v397
  %v439 = vadd.f32 %v311, %v397
  %v440 = vadd.f32 %v312, %v402
  %v441 = vadd.f32 %v313, %v402
  %v442 = vadd.f32 %v314, %v407
  %v443 = vadd.f32 %v315, %v407
  %v444 = vadd.f32 %v316, %v412
  %v445 = vadd.f32 %v317, %v412
  %v446 = vtanh.pop %v414
  %v447 = vtanh.pop %v415
  %v448 = vtanh.pop %v416
  %v449 = vtanh.pop %v417
  %v450 = vtanh.pop %v418
  %v451 = vtanh.pop %v419
  %v452 = vtanh.pop %v420
  %v453 = vtanh.pop %v421
  %v454 = vtanh.pop %v422
  %v455 = vtanh.pop %v423
  %v456 = vtanh.pop %v424
  %v457 = vtanh.pop %v425
  %v458 = vtanh.pop %v426
  %v459 = vtanh.pop %v427
  %v460 = vtanh.pop %v428
  %v461 = vtanh.pop %v429
  %v462 = vtanh.pop %v430
  %v463 = vtanh.pop %v431
  %v464 = vtanh.pop %v432
  %v465 = vtanh.pop %v433
  %v466 = vtanh.pop %v434
  %v467 = vtanh.pop %v435
  %v468 = vtanh.pop %v436
  %v469 = vtanh.pop %v437
  %v470 = vtanh.pop %v438
  %v471 = vtanh.pop %v439
  %v472 = vtanh.pop %v440
  %v473 = vtanh.pop %v441
  %v474 = vtanh.pop %v442
  %v475 = vtanh.pop %v443
  %v476 = vtanh.pop %v444
  %v477 = vtanh.pop %v445
  %v478 = vld [vmem:[%s2] sm:$0xff]
  %v479 = vld [vmem:[%s2 + $0x8] sm:$0xff]
  %v480 = vld [vmem:[%s2 + $0x10] sm:$0xff]
  %v481 = vld [vmem:[%s2 + $0x18] sm:$0xff]
  %v482 = vld [vmem:[%s2 + $0x20] sm:$0xff]
  %v483 = vld [vmem:[%s2 + $0x28] sm:$0xff]
  %v484 = vld [vmem:[%s2 + $0x30] sm:$0xff]
  %v485 = vld [vmem:[%s2 + $0x38] sm:$0xff]
  %v486 = vld [vmem:[%s2 + $0x40] sm:$0xff]
  %v487 = vld [vmem:[%s2 + $0x48] sm:$0xff]
  %v488 = vld [vmem:[%s2 + $0x50] sm:$0xff]
  %v489 = vld [vmem:[%s2 + $0x58] sm:$0xff]
  %v490 = vld [vmem:[%s2 + $0x60] sm:$0xff]
  %v491 = vld [vmem:[%s2 + $0x68] sm:$0xff]
  %v492 = vld [vmem:[%s2 + $0x70] sm:$0xff]
  %v493 = vld [vmem:[%s2 + $0x78] sm:$0xff]
  %494 = vset.pattern.permute.xlu0 1
  %495 = vperm.xlu0 %494, %v318
  %v496 = vpop.permute.xlu0 %495
  %498 = vset.pattern.permute.xlu0 1
  %499 = vperm.xlu0 %498, %v319
  %v500 = vpop.permute.xlu0 %499
  %502 = vset.pattern.permute.xlu0 1
  %503 = vperm.xlu0 %502, %v320
  %v504 = vpop.permute.xlu0 %503
  %506 = vset.pattern.permute.xlu0 1
  %507 = vperm.xlu0 %506, %v321
  %v508 = vpop.permute.xlu0 %507
  %510 = vset.pattern.permute.xlu0 1
  %511 = vperm.xlu0 %510, %v322
  %v512 = vpop.permute.xlu0 %511
  %514 = vset.pattern.permute.xlu0 1
  %515 = vperm.xlu0 %514, %v323
  %v516 = vpop.permute.xlu0 %515
  %518 = vset.pattern.permute.xlu0 1
  %519 = vperm.xlu0 %518, %v324
  %v520 = vpop.permute.xlu0 %519
  %522 = vset.pattern.permute.xlu0 1
  %523 = vperm.xlu0 %522, %v325
  %v524 = vpop.permute.xlu0 %523
  %526 = vset.pattern.permute.xlu0 1
  %527 = vperm.xlu0 %526, %v326
  %v528 = vpop.permute.xlu0 %527
  %530 = vset.pattern.permute.xlu0 1
  %531 = vperm.xlu0 %530, %v327
  %v532 = vpop.permute.xlu0 %531
  %534 = vset.pattern.permute.xlu0 1
  %535 = vperm.xlu0 %534, %v328
  %v536 = vpop.permute.xlu0 %535
  %538 = vset.pattern.permute.xlu0 1
  %539 = vperm.xlu0 %538, %v329
  %v540 = vpop.permute.xlu0 %539
  %542 = vset.pattern.permute.xlu0 1
  %543 = vperm.xlu0 %542, %v330
  %v544 = vpop.permute.xlu0 %543
  %546 = vset.pattern.permute.xlu0 1
  %547 = vperm.xlu0 %546, %v331
  %v548 = vpop.permute.xlu0 %547
  %550 = vset.pattern.permute.xlu0 1
  %551 = vperm.xlu0 %550, %v332
  %v552 = vpop.permute.xlu0 %551
  %554 = vset.pattern.permute.xlu0 1
  %555 = vperm.xlu0 %554, %v333
  %v556 = vpop.permute.xlu0 %555
  %558 = vmatprep.subr.mxu0 %v447
  %559 = vmatpush1.msra.mxu0 %v446
  %560 = vmatprep.subr.mxu0 %v449
  %561 = vmatpush1.msra.mxu0 %v448
  %562 = vmatprep.subr.mxu0 %v451
  %563 = vmatpush1.msra.mxu0 %v450
  %564 = vmatprep.subr.mxu0 %v453
  %565 = vmatpush1.msra.mxu0 %v452
  %566 = vmatprep.subr.mxu0 %v455
  %567 = vmatpush1.msra.mxu0 %v454
  %568 = vmatprep.subr.mxu0 %v457
  %569 = vmatpush1.msra.mxu0 %v456
  %570 = vmatprep.subr.mxu0 %v459
  %571 = vmatpush1.msra.mxu0 %v458
  %572 = vmatprep.subr.mxu0 %v461
  %573 = vmatpush1.msra.mxu0 %v460
  %574 = vmatprep.subr.mxu0 %v463
  %575 = vmatpush1.msra.mxu0 %v462
  %576 = vmatprep.subr.mxu0 %v465
  %577 = vmatpush1.msra.mxu0 %v464
  %578 = vmatprep.subr.mxu0 %v467
  %579 = vmatpush1.msra.mxu0 %v466
  %580 = vmatprep.subr.mxu0 %v469
  %581 = vmatpush1.msra.mxu0 %v468
  %582 = vmatprep.subr.mxu0 %v471
  %583 = vmatpush1.msra.mxu0 %v470
  %584 = vmatprep.subr.mxu0 %v473
  %585 = vmatpush1.msra.mxu0 %v472
  %586 = vmatprep.subr.mxu0 %v475
  %587 = vmatpush1.msra.mxu0 %v474
  %588 = vmatprep.subr.mxu0 %v477
  %589 = vmatpush1.msra.mxu0 %v476
  %590 = vmatprep.subr.mxu0 0.0
  %591 = vmatpush1.msra.mxu0 0.0
  %592 = vmatprep.subr.mxu0 0.0
  %593 = vmatpush1.msra.mxu0 0.0
  %594 = vmatprep.subr.mxu0 0.0
  %595 = vmatpush1.msra.mxu0 0.0
  %596 = vmatprep.subr.mxu0 0.0
  %597 = vmatpush1.msra.mxu0 0.0
  %598 = vmatprep.subr.mxu0 0.0
  %599 = vmatpush1.msra.mxu0 0.0
  %600 = vmatprep.subr.mxu0 0.0
  %601 = vmatpush1.msra.mxu0 0.0
  %602 = vmatprep.subr.mxu0 0.0
  %603 = vmatpush1.msra.mxu0 0.0
  %604 = vmatprep.subr.mxu0 0.0
  %605 = vmatpush1.msra.mxu0 0.0
  %606 = vmatprep.subr.mxu0 0.0
  %607 = vmatpush1.msra.mxu0 0.0
  %608 = vmatprep.subr.mxu0 0.0
  %609 = vmatpush1.msra.mxu0 0.0
  %610 = vmatprep.subr.mxu0 0.0
  %611 = vmatpush1.msra.mxu0 0.0
  %612 = vmatprep.subr.mxu0 0.0
  %613 = vmatpush1.msra.mxu0 0.0
  %614 = vmatprep.subr.mxu0 0.0
  %615 = vmatpush1.msra.mxu0 0.0
  %616 = vmatprep.subr.mxu0 0.0
  %617 = vmatpush1.msra.mxu0 0.0
  %618 = vmatprep.subr.mxu0 0.0
  %619 = vmatpush1.msra.mxu0 0.0
  %620 = vmatprep.subr.mxu0 0.0
  %621 = vmatpush1.msra.mxu0 0.0
  %622 = vmatprep.mubr.f32.mxu0 0.0
  %623 = vmatmul.mubr.f32.gmra.mrb[0].mxu0 %v478
  %v624 = vpop.f32.mrb[0].mxu0
  %v625 = vadd.f32 %v496, %v624
  %v626 = vpop.f32.mrb[0].mxu0
  %v627 = vadd.f32 %v496, %v626
  %628 = vmatprep.mubr.f32.mxu0 0.0
  %629 = vmatmul.mubr.f32.gmra.mrb[0].mxu0 %v479
  %v630 = vpop.f32.mrb[0].mxu0
  %v631 = vadd.f32 %v500, %v630
  %v632 = vpop.f32.mrb[0].mxu0
  %v633 = vadd.f32 %v500, %v632
  %634 = vmatprep.mubr.f32.mxu0 0.0
  %635 = vmatmul.mubr.f32.gmra.mrb[0].mxu0 %v480
  %v636 = vpop.f32.mrb[0].mxu0
  %v637 = vadd.f32 %v504, %v636
  %v638 = vpop.f32.mrb[0].mxu0
  %v639 = vadd.f32 %v504, %v638
  %640 = vmatprep.mubr.f32.mxu0 0.0
  %641 = vmatmul.mubr.f32.gmra.mrb[0].mxu0 %v481
  %v642 = vpop.f32.mrb[0].mxu0
  %v643 = vadd.f32 %v508, %v642
  %v644 = vpop.f32.mrb[0].mxu0
  %v645 = vadd.f32 %v508, %v644
  %646 = vmatprep.mubr.f32.mxu0 0.0
  %647 = vmatmul.mubr.f32.gmra.mrb[0].mxu0 %v482
  %v648 = vpop.f32.mrb[0].mxu0
  %v649 = vadd.f32 %v512, %v648
  %v650 = vpop.f32.mrb[0].mxu0
  %v651 = vadd.f32 %v512, %v650
  %652 = vmatprep.mubr.f32.mxu0 0.0
  %653 = vmatmul.mubr.f32.gmra.mrb[0].mxu0 %v483
  %v654 = vpop.f32.mrb[0].mxu0
  %v655 = vadd.f32 %v516, %v654
  %v656 = vpop.f32.mrb[0].mxu0
  %v657 = vadd.f32 %v516, %v656
  %658 = vmatprep.mubr.f32.mxu0 0.0
  %659 = vmatmul.mubr.f32.gmra.mrb[0].mxu0 %v484
  %v660 = vpop.f32.mrb[0].mxu0
  %v661 = vadd.f32 %v520, %v660
  %v662 = vpop.f32.mrb[0].mxu0
  %v663 = vadd.f32 %v520, %v662
  %664 = vmatprep.mubr.f32.mxu0 0.0
  %665 = vmatmul.mubr.f32.gmra.mrb[0].mxu0 %v485
  %v666 = vpop.f32.mrb[0].mxu0
  %v667 = vadd.f32 %v524, %v666
  %v668 = vpop.f32.mrb[0].mxu0
  %v669 = vadd.f32 %v524, %v668
  %670 = vmatprep.mubr.f32.mxu0 0.0
  %671 = vmatmul.mubr.f32.gmra.mrb[0].mxu0 %v486
  %v672 = vpop.f32.mrb[0].mxu0
  %v673 = vadd.f32 %v528, %v672
  %v674 = vpop.f32.mrb[0].mxu0
  %v675 = vadd.f32 %v528, %v674
  %676 = vmatprep.mubr.f32.mxu0 0.0
  %677 = vmatmul.mubr.f32.gmra.mrb[0].mxu0 %v487
  %v678 = vpop.f32.mrb[0].mxu0
  %v679 = vadd.f32 %v532, %v678
  %v680 = vpop.f32.mrb[0].mxu0
  %v681 = vadd.f32 %v532, %v680
  %682 = vmatprep.mubr.f32.mxu0 0.0
  %683 = vmatmul.mubr.f32.gmra.mrb[0].mxu0 %v488
  %v684 = vpop.f32.mrb[0].mxu0
  %v685 = vadd.f32 %v536, %v684
  %v686 = vpop.f32.mrb[0].mxu0
  %v687 = vadd.f32 %v536, %v686
  %688 = vmatprep.mubr.f32.mxu0 0.0
  %689 = vmatmul.mubr.f32.gmra.mrb[0].mxu0 %v489
  %v690 = vpop.f32.mrb[0].mxu0
  %v691 = vadd.f32 %v540, %v690
  %v692 = vpop.f32.mrb[0].mxu0
  %v693 = vadd.f32 %v540, %v692
  %694 = vmatprep.mubr.f32.mxu0 0.0
  %695 = vmatmul.mubr.f32.gmra.mrb[0].mxu0 %v490
  %v696 = vpop.f32.mrb[0].mxu0
  %v697 = vadd.f32 %v544, %v696
  %v698 = vpop.f32.mrb[0].mxu0
  %v699 = vadd.f32 %v544, %v698
  %700 = vmatprep.mubr.f32.mxu0 0.0
  %701 = vmatmul.mubr.f32.gmra.mrb[0].mxu0 %v491
  %v702 = vpop.f32.mrb[0].mxu0
  %v703 = vadd.f32 %v548, %v702
  %v704 = vpop.f32.mrb[0].mxu0
  %v705 = vadd.f32 %v548, %v704
  %706 = vmatprep.mubr.f32.mxu0 0.0
  %707 = vmatmul.mubr.f32.gmra.mrb[0].mxu0 %v492
  %v708 = vpop.f32.mrb[0].mxu0
  %v709 = vadd.f32 %v552, %v708
  %v710 = vpop.f32.mrb[0].mxu0
  %v711 = vadd.f32 %v552, %v710
  %712 = vmatprep.mubr.f32.mxu0 0.0
  %713 = vmatmul.mubr.f32.gmra.mrb[0].mxu0 %v493
  %v714 = vpop.f32.mrb[0].mxu0
  %v715 = vadd.f32 %v556, %v714
  %v716 = vpop.f32.mrb[0].mxu0
  %v717 = vadd.f32 %v556, %v716
  %718 = vdwg.mxu0
  %v719 = vtanh.pop %v625
  %v720 = vtanh.pop %v627
  %v721 = vtanh.pop %v631
  %v722 = vtanh.pop %v633
  %v723 = vtanh.pop %v637
  %v724 = vtanh.pop %v639
  %v725 = vtanh.pop %v643
  %v726 = vtanh.pop %v645
  %v727 = vtanh.pop %v649
  %v728 = vtanh.pop %v651
  %v729 = vtanh.pop %v655
  %v730 = vtanh.pop %v657
  %v731 = vtanh.pop %v661
  %v732 = vtanh.pop %v663
  %v733 = vtanh.pop %v667
  %v734 = vtanh.pop %v669
  %v735 = vtanh.pop %v673
  %v736 = vtanh.pop %v675
  %v737 = vtanh.pop %v679
  %v738 = vtanh.pop %v681
  %v739 = vtanh.pop %v685
  %v740 = vtanh.pop %v687
  %v741 = vtanh.pop %v691
  %v742 = vtanh.pop %v693
  %v743 = vtanh.pop %v697
  %v744 = vtanh.pop %v699
  %v745 = vtanh.pop %v703
  %v746 = vtanh.pop %v705
  %v747 = vtanh.pop %v709
  %v748 = vtanh.pop %v711
  %v749 = vtanh.pop %v715
  %v750 = vtanh.pop %v717
  %s751 = scalar_lea.vmem %s2, 128
  %v752 = vld [vmem:[%s751] sm:$0xff]
  %v753 = vld [vmem:[%s751 + $0x8] sm:$0xff]
  %v754 = vld [vmem:[%s751 + $0x10] sm:$0xff]
  %v755 = vld [vmem:[%s751 + $0x18] sm:$0xff]
  %v756 = vld [vmem:[%s751 + $0x20] sm:$0xff]
  %v757 = vld [vmem:[%s751 + $0x28] sm:$0xff]
  %v758 = vld [vmem:[%s751 + $0x30] sm:$0xff]
  %v759 = vld [vmem:[%s751 + $0x38] sm:$0xff]
  %v760 = vld [vmem:[%s751 + $0x40] sm:$0xff]
  %v761 = vld [vmem:[%s751 + $0x48] sm:$0xff]
  %v762 = vld [vmem:[%s751 + $0x50] sm:$0xff]
  %v763 = vld [vmem:[%s751 + $0x58] sm:$0xff]
  %v764 = vld [vmem:[%s751 + $0x60] sm:$0xff]
  %v765 = vld [vmem:[%s751 + $0x68] sm:$0xff]
  %v766 = vld [vmem:[%s751 + $0x70] sm:$0xff]
  %v767 = vld [vmem:[%s751 + $0x78] sm:$0xff]
  %768 = vset.pattern.permute.xlu0 2
  %769 = vperm.xlu0 %768, %v318
  %v770 = vpop.permute.xlu0 %769
  %772 = vset.pattern.permute.xlu0 2
  %773 = vperm.xlu0 %772, %v319
  %v774 = vpop.permute.xlu0 %773
  %776 = vset.pattern.permute.xlu0 2
  %777 = vperm.xlu0 %776, %v320
  %v778 = vpop.permute.xlu0 %777
  %780 = vset.pattern.permute.xlu0 2
  %781 = vperm.xlu0 %780, %v321
  %v782 = vpop.permute.xlu0 %781
  %784 = vset.pattern.permute.xlu0 2
  %785 = vperm.xlu0 %784, %v322
  %v786 = vpop.permute.xlu0 %785
  %788 = vset.pattern.permute.xlu0 2
  %789 = vperm.xlu0 %788, %v323
  %v790 = vpop.permute.xlu0 %789
  %792 = vset.pattern.permute.xlu0 2
  %793 = vperm.xlu0 %792, %v324
  %v794 = vpop.permute.xlu0 %793
  %796 = vset.pattern.permute.xlu0 2
  %797 = vperm.xlu0 %796, %v325
  %v798 = vpop.permute.xlu0 %797
  %800 = vset.pattern.permute.xlu0 2
  %801 = vperm.xlu0 %800, %v326
  %v802 = vpop.permute.xlu0 %801
  %804 = vset.pattern.permute.xlu0 2
  %805 = vperm.xlu0 %804, %v327
  %v806 = vpop.permute.xlu0 %805
  %808 = vset.pattern.permute.xlu0 2
  %809 = vperm.xlu0 %808, %v328
  %v810 = vpop.permute.xlu0 %809
  %812 = vset.pattern.permute.xlu0 2
  %813 = vperm.xlu0 %812, %v329
  %v814 = vpop.permute.xlu0 %813
  %816 = vset.pattern.permute.xlu0 2
  %817 = vperm.xlu0 %816, %v330
  %v818 = vpop.permute.xlu0 %817
  %820 = vset.pattern.permute.xlu0 2
  %821 = vperm.xlu0 %820, %v331
  %v822 = vpop.permute.xlu0 %821
  %824 = vset.pattern.permute.xlu0 2
  %825 = vperm.xlu0 %824, %v332
  %v826 = vpop.permute.xlu0 %825
  %828 = vset.pattern.permute.xlu0 2
  %829 = vperm.xlu0 %828, %v333
  %v830 = vpop.permute.xlu0 %829
  %832 = vmatprep.subr.mxu0 %v720
  %833 = vmatpush1.msra.mxu0 %v719
  %834 = vmatprep.subr.mxu0 %v722
  %835 = vmatpush1.msra.mxu0 %v721
  %836 = vmatprep.subr.mxu0 %v724
  %837 = vmatpush1.msra.mxu0 %v723
  %838 = vmatprep.subr.mxu0 %v726
  %839 = vmatpush1.msra.mxu0 %v725
  %840 = vmatprep.subr.mxu0 %v728
  %841 = vmatpush1.msra.mxu0 %v727
  %842 = vmatprep.subr.mxu0 %v730
  %843 = vmatpush1.msra.mxu0 %v729
  %844 = vmatprep.subr.mxu0 %v732
  %845 = vmatpush1.msra.mxu0 %v731
  %846 = vmatprep.subr.mxu0 %v734
  %847 = vmatpush1.msra.mxu0 %v733
  %848 = vmatprep.subr.mxu0 %v736
  %849 = vmatpush1.msra.mxu0 %v735
  %850 = vmatprep.subr.mxu0 %v738
  %851 = vmatpush1.msra.mxu0 %v737
  %852 = vmatprep.subr.mxu0 %v740
  %853 = vmatpush1.msra.mxu0 %v739
  %854 = vmatprep.subr.mxu0 %v742
  %855 = vmatpush1.msra.mxu0 %v741
  %856 = vmatprep.subr.mxu0 %v744
  %857 = vmatpush1.msra.mxu0 %v743
  %858 = vmatprep.subr.mxu0 %v746
  %859 = vmatpush1.msra.mxu0 %v745
  %860 = vmatprep.subr.mxu0 %v748
  %861 = vmatpush1.msra.mxu0 %v747
  %862 = vmatprep.subr.mxu0 %v750
  %863 = vmatpush1.msra.mxu0 %v749
  %864 = vmatprep.subr.mxu0 0.0
  %865 = vmatpush1.msra.mxu0 0.0
  %866 = vmatprep.subr.mxu0 0.0
  %867 = vmatpush1.msra.mxu0 0.0
  %868 = vmatprep.subr.mxu0 0.0
  %869 = vmatpush1.msra.mxu0 0.0
  %870 = vmatprep.subr.mxu0 0.0
  %871 = vmatpush1.msra.mxu0 0.0
  %872 = vmatprep.subr.mxu0 0.0
  %873 = vmatpush1.msra.mxu0 0.0
  %874 = vmatprep.subr.mxu0 0.0
  %875 = vmatpush1.msra.mxu0 0.0
  %876 = vmatprep.subr.mxu0 0.0
  %877 = vmatpush1.msra.mxu0 0.0
  %878 = vmatprep.subr.mxu0 0.0
  %879 = vmatpush1.msra.mxu0 0.0
  %880 = vmatprep.subr.mxu0 0.0
  %881 = vmatpush1.msra.mxu0 0.0
  %882 = vmatprep.subr.mxu0 0.0
  %883 = vmatpush1.msra.mxu0 0.0
  %884 = vmatprep.subr.mxu0 0.0
  %885 = vmatpush1.msra.mxu0 0.0
  %886 = vmatprep.subr.mxu0 0.0
  %887 = vmatpush1.msra.mxu0 0.0
  %888 = vmatprep.subr.mxu0 0.0
  %889 = vmatpush1.msra.mxu0 0.0
  %890 = vmatprep.subr.mxu0 0.0
  %891 = vmatpush1.msra.mxu0 0.0
  %892 = vmatprep.subr.mxu0 0.0
  %893 = vmatpush1.msra.mxu0 0.0
  %894 = vmatprep.subr.mxu0 0.0
  %895 = vmatpush1.msra.mxu0 0.0
  %896 = vmatprep.mubr.f32.mxu0 0.0
  %897 = vmatmul.mubr.f32.gmra.mrb[0].mxu0 %v752
  %v898 = vpop.f32.mrb[0].mxu0
  %v899 = vadd.f32 %v770, %v898
  %v900 = vpop.f32.mrb[0].mxu0
  %v901 = vadd.f32 %v770, %v900
  %902 = vmatprep.mubr.f32.mxu0 0.0
  %903 = vmatmul.mubr.f32.gmra.mrb[0].mxu0 %v753
  %v904 = vpop.f32.mrb[0].mxu0
  %v905 = vadd.f32 %v774, %v904
  %v906 = vpop.f32.mrb[0].mxu0
  %v907 = vadd.f32 %v774, %v906
  %908 = vmatprep.mubr.f32.mxu0 0.0
  %909 = vmatmul.mubr.f32.gmra.mrb[0].mxu0 %v754
  %v910 = vpop.f32.mrb[0].mxu0
  %v911 = vadd.f32 %v778, %v910
  %v912 = vpop.f32.mrb[0].mxu0
  %v913 = vadd.f32 %v778, %v912
  %914 = vmatprep.mubr.f32.mxu0 0.0
  %915 = vmatmul.mubr.f32.gmra.mrb[0].mxu0 %v755
  %v916 = vpop.f32.mrb[0].mxu0
  %v917 = vadd.f32 %v782, %v916
  %v918 = vpop.f32.mrb[0].mxu0
  %v919 = vadd.f32 %v782, %v918
  %920 = vmatprep.mubr.f32.mxu0 0.0
  %921 = vmatmul.mubr.f32.gmra.mrb[0].mxu0 %v756
  %v922 = vpop.f32.mrb[0].mxu0
  %v923 = vadd.f32 %v786, %v922
  %v924 = vpop.f32.mrb[0].mxu0
  %v925 = vadd.f32 %v786, %v924
  %926 = vmatprep.mubr.f32.mxu0 0.0
  %927 = vmatmul.mubr.f32.gmra.mrb[0].mxu0 %v757
  %v928 = vpop.f32.mrb[0].mxu0
  %v929 = vadd.f32 %v790, %v928
  %v930 = vpop.f32.mrb[0].mxu0
  %v931 = vadd.f32 %v790, %v930
  %932 = vmatprep.mubr.f32.mxu0 0.0
  %933 = vmatmul.mubr.f32.gmra.mrb[0].mxu0 %v758
  %v934 = vpop.f32.mrb[0].mxu0
  %v935 = vadd.f32 %v794, %v934
  %v936 = vpop.f32.mrb[0].mxu0
  %v937 = vadd.f32 %v794, %v936
  %938 = vmatprep.mubr.f32.mxu0 0.0
  %939 = vmatmul.mubr.f32.gmra.mrb[0].mxu0 %v759
  %v940 = vpop.f32.mrb[0].mxu0
  %v941 = vadd.f32 %v798, %v940
  %v942 = vpop.f32.mrb[0].mxu0
  %v943 = vadd.f32 %v798, %v942
  %944 = vmatprep.mubr.f32.mxu0 0.0
  %945 = vmatmul.mubr.f32.gmra.mrb[0].mxu0 %v760
  %v946 = vpop.f32.mrb[0].mxu0
  %v947 = vadd.f32 %v802, %v946
  %v948 = vpop.f32.mrb[0].mxu0
  %v949 = vadd.f32 %v802, %v948
  %950 = vmatprep.mubr.f32.mxu0 0.0
  %951 = vmatmul.mubr.f32.gmra.mrb[0].mxu0 %v761
  %v952 = vpop.f32.mrb[0].mxu0
  %v953 = vadd.f32 %v806, %v952
  %v954 = vpop.f32.mrb[0].mxu0
  %v955 = vadd.f32 %v806, %v954
  %956 = vmatprep.mubr.f32.mxu0 0.0
  %957 = vmatmul.mubr.f32.gmra.mrb[0].mxu0 %v762
  %v958 = vpop.f32.mrb[0].mxu0
  %v959 = vadd.f32 %v810, %v958
  %v960 = vpop.f32.mrb[0].mxu0
  %v961 = vadd.f32 %v810, %v960
  %962 = vmatprep.mubr.f32.mxu0 0.0
  %963 = vmatmul.mubr.f32.gmra.mrb[0].mxu0 %v763
  %v964 = vpop.f32.mrb[0].mxu0
  %v965 = vadd.f32 %v814, %v964
  %v966 = vpop.f32.mrb[0].mxu0
  %v967 = vadd.f32 %v814, %v966
  %968 = vmatprep.mubr.f32.mxu0 0.0
  %969 = vmatmul.mubr.f32.gmra.mrb[0].mxu0 %v764
  %v970 = vpop.f32.mrb[0].mxu0
  %v971 = vadd.f32 %v818, %v970
  %v972 = vpop.f32.mrb[0].mxu0
  %v973 = vadd.f32 %v818, %v972
  %974 = vmatprep.mubr.f32.mxu0 0.0
  %975 = vmatmul.mubr.f32.gmra.mrb[0].mxu0 %v765
  %v976 = vpop.f32.mrb[0].mxu0
  %v977 = vadd.f32 %v822, %v976
  %v978 = vpop.f32.mrb[0].mxu0
  %v979 = vadd.f32 %v822, %v978
  %980 = vmatprep.mubr.f32.mxu0 0.0
  %981 = vmatmul.mubr.f32.gmra.mrb[0].mxu0 %v766
  %v982 = vpop.f32.mrb[0].mxu0
  %v983 = vadd.f32 %v826, %v982
  %v984 = vpop.f32.mrb[0].mxu0
  %v985 = vadd.f32 %v826, %v984
  %986 = vmatprep.mubr.f32.mxu0 0.0
  %987 = vmatmul.mubr.f32.gmra.mrb[0].mxu0 %v767
  %v988 = vpop.f32.mrb[0].mxu0
  %v989 = vadd.f32 %v830, %v988
  %v990 = vpop.f32.mrb[0].mxu0
  %v991 = vadd.f32 %v830, %v990
  %992 = vdwg.mxu0
  %v993 = vtanh.pop %v899
  %v994 = vtanh.pop %v901
  %v995 = vtanh.pop %v905
  %v996 = vtanh.pop %v907
  %v997 = vtanh.pop %v911
  %v998 = vtanh.pop %v913
  %v999 = vtanh.pop %v917
  %v1000 = vtanh.pop %v919
  %v1001 = vtanh.pop %v923
  %v1002 = vtanh.pop %v925
  %v1003 = vtanh.pop %v929
  %v1004 = vtanh.pop %v931
  %v1005 = vtanh.pop %v935
  %v1006 = vtanh.pop %v937
  %v1007 = vtanh.pop %v941
  %v1008 = vtanh.pop %v943
  %v1009 = vtanh.pop %v947
  %v1010 = vtanh.pop %v949
  %v1011 = vtanh.pop %v953
  %v1012 = vtanh.pop %v955
  %v1013 = vtanh.pop %v959
  %v1014 = vtanh.pop %v961
  %v1015 = vtanh.pop %v965
  %v1016 = vtanh.pop %v967
  %v1017 = vtanh.pop %v971
  %v1018 = vtanh.pop %v973
  %v1019 = vtanh.pop %v977
  %v1020 = vtanh.pop %v979
  %v1021 = vtanh.pop %v983
  %v1022 = vtanh.pop %v985
  %v1023 = vtanh.pop %v989
  %v1024 = vtanh.pop %v991
  %s1025 = scalar_lea.vmem %s2, 256
  %v1026 = vld [vmem:[%s1025] sm:$0xff]
  %v1027 = vld [vmem:[%s1025 + $0x8] sm:$0xff]
  %v1028 = vld [vmem:[%s1025 + $0x10] sm:$0xff]
  %v1029 = vld [vmem:[%s1025 + $0x18] sm:$0xff]
  %v1030 = vld [vmem:[%s1025 + $0x20] sm:$0xff]
  %v1031 = vld [vmem:[%s1025 + $0x28] sm:$0xff]
  %v1032 = vld [vmem:[%s1025 + $0x30] sm:$0xff]
  %v1033 = vld [vmem:[%s1025 + $0x38] sm:$0xff]
  %v1034 = vld [vmem:[%s1025 + $0x40] sm:$0xff]
  %v1035 = vld [vmem:[%s1025 + $0x48] sm:$0xff]
  %v1036 = vld [vmem:[%s1025 + $0x50] sm:$0xff]
  %v1037 = vld [vmem:[%s1025 + $0x58] sm:$0xff]
  %v1038 = vld [vmem:[%s1025 + $0x60] sm:$0xff]
  %v1039 = vld [vmem:[%s1025 + $0x68] sm:$0xff]
  %v1040 = vld [vmem:[%s1025 + $0x70] sm:$0xff]
  %v1041 = vld [vmem:[%s1025 + $0x78] sm:$0xff]
  %1042 = vset.pattern.permute.xlu0 3
  %1043 = vperm.xlu0 %1042, %v318
  %v1044 = vpop.permute.xlu0 %1043
  %1046 = vset.pattern.permute.xlu0 3
  %1047 = vperm.xlu0 %1046, %v319
  %v1048 = vpop.permute.xlu0 %1047
  %1050 = vset.pattern.permute.xlu0 3
  %1051 = vperm.xlu0 %1050, %v320
  %v1052 = vpop.permute.xlu0 %1051
  %1054 = vset.pattern.permute.xlu0 3
  %1055 = vperm.xlu0 %1054, %v321
  %v1056 = vpop.permute.xlu0 %1055
  %1058 = vset.pattern.permute.xlu0 3
  %1059 = vperm.xlu0 %1058, %v322
  %v1060 = vpop.permute.xlu0 %1059
  %1062 = vset.pattern.permute.xlu0 3
  %1063 = vperm.xlu0 %1062, %v323
  %v1064 = vpop.permute.xlu0 %1063
  %1066 = vset.pattern.permute.xlu0 3
  %1067 = vperm.xlu0 %1066, %v324
  %v1068 = vpop.permute.xlu0 %1067
  %1070 = vset.pattern.permute.xlu0 3
  %1071 = vperm.xlu0 %1070, %v325
  %v1072 = vpop.permute.xlu0 %1071
  %1074 = vset.pattern.permute.xlu0 3
  %1075 = vperm.xlu0 %1074, %v326
  %v1076 = vpop.permute.xlu0 %1075
  %1078 = vset.pattern.permute.xlu0 3
  %1079 = vperm.xlu0 %1078, %v327
  %v1080 = vpop.permute.xlu0 %1079
  %1082 = vset.pattern.permute.xlu0 3
  %1083 = vperm.xlu0 %1082, %v328
  %v1084 = vpop.permute.xlu0 %1083
  %1086 = vset.pattern.permute.xlu0 3
  %1087 = vperm.xlu0 %1086, %v329
  %v1088 = vpop.permute.xlu0 %1087
  %1090 = vset.pattern.permute.xlu0 3
  %1091 = vperm.xlu0 %1090, %v330
  %v1092 = vpop.permute.xlu0 %1091
  %1094 = vset.pattern.permute.xlu0 3
  %1095 = vperm.xlu0 %1094, %v331
  %v1096 = vpop.permute.xlu0 %1095
  %1098 = vset.pattern.permute.xlu0 3
  %1099 = vperm.xlu0 %1098, %v332
  %v1100 = vpop.permute.xlu0 %1099
  %1102 = vset.pattern.permute.xlu0 3
  %1103 = vperm.xlu0 %1102, %v333
  %v1104 = vpop.permute.xlu0 %1103
  %1106 = vmatprep.subr.mxu0 %v994
  %1107 = vmatpush1.msra.mxu0 %v993
  %1108 = vmatprep.subr.mxu0 %v996
  %1109 = vmatpush1.msra.mxu0 %v995
  %1110 = vmatprep.subr.mxu0 %v998
  %1111 = vmatpush1.msra.mxu0 %v997
  %1112 = vmatprep.subr.mxu0 %v1000
  %1113 = vmatpush1.msra.mxu0 %v999
  %1114 = vmatprep.subr.mxu0 %v1002
  %1115 = vmatpush1.msra.mxu0 %v1001
  %1116 = vmatprep.subr.mxu0 %v1004
  %1117 = vmatpush1.msra.mxu0 %v1003
  %1118 = vmatprep.subr.mxu0 %v1006
  %1119 = vmatpush1.msra.mxu0 %v1005
  %1120 = vmatprep.subr.mxu0 %v1008
  %1121 = vmatpush1.msra.mxu0 %v1007
  %1122 = vmatprep.subr.mxu0 %v1010
  %1123 = vmatpush1.msra.mxu0 %v1009
  %1124 = vmatprep.subr.mxu0 %v1012
  %1125 = vmatpush1.msra.mxu0 %v1011
  %1126 = vmatprep.subr.mxu0 %v1014
  %1127 = vmatpush1.msra.mxu0 %v1013
  %1128 = vmatprep.subr.mxu0 %v1016
  %1129 = vmatpush1.msra.mxu0 %v1015
  %1130 = vmatprep.subr.mxu0 %v1018
  %1131 = vmatpush1.msra.mxu0 %v1017
  %1132 = vmatprep.subr.mxu0 %v1020
  %1133 = vmatpush1.msra.mxu0 %v1019
  %1134 = vmatprep.subr.mxu0 %v1022
  %1135 = vmatpush1.msra.mxu0 %v1021
  %1136 = vmatprep.subr.mxu0 %v1024
  %1137 = vmatpush1.msra.mxu0 %v1023
  %1138 = vmatprep.subr.mxu0 0.0
  %1139 = vmatpush1.msra.mxu0 0.0
  %1140 = vmatprep.subr.mxu0 0.0
  %1141 = vmatpush1.msra.mxu0 0.0
  %1142 = vmatprep.subr.mxu0 0.0
  %1143 = vmatpush1.msra.mxu0 0.0
  %1144 = vmatprep.subr.mxu0 0.0
  %1145 = vmatpush1.msra.mxu0 0.0
  %1146 = vmatprep.subr.mxu0 0.0
  %1147 = vmatpush1.msra.mxu0 0.0
  %1148 = vmatprep.subr.mxu0 0.0
  %1149 = vmatpush1.msra.mxu0 0.0
  %1150 = vmatprep.subr.mxu0 0.0
  %1151 = vmatpush1.msra.mxu0 0.0
  %1152 = vmatprep.subr.mxu0 0.0
  %1153 = vmatpush1.msra.mxu0 0.0
  %1154 = vmatprep.subr.mxu0 0.0
  %1155 = vmatpush1.msra.mxu0 0.0
  %1156 = vmatprep.subr.mxu0 0.0
  %1157 = vmatpush1.msra.mxu0 0.0
  %1158 = vmatprep.subr.mxu0 0.0
  %1159 = vmatpush1.msra.mxu0 0.0
  %1160 = vmatprep.subr.mxu0 0.0
  %1161 = vmatpush1.msra.mxu0 0.0
  %1162 = vmatprep.subr.mxu0 0.0
  %1163 = vmatpush1.msra.mxu0 0.0
  %1164 = vmatprep.subr.mxu0 0.0
  %1165 = vmatpush1.msra.mxu0 0.0
  %1166 = vmatprep.subr.mxu0 0.0
  %1167 = vmatpush1.msra.mxu0 0.0
  %1168 = vmatprep.subr.mxu0 0.0
  %1169 = vmatpush1.msra.mxu0 0.0
  %1170 = vmatprep.mubr.f32.mxu0 0.0
  %1171 = vmatmul.mubr.f32.gmra.mrb[0].mxu0 %v1026
  %v1172 = vpop.f32.mrb[0].mxu0
  %v1173 = vadd.f32 %v1044, %v1172
  %v1174 = vpop.f32.mrb[0].mxu0
  %v1175 = vadd.f32 %v1044, %v1174
  %1176 = vmatprep.mubr.f32.mxu0 0.0
  %1177 = vmatmul.mubr.f32.gmra.mrb[0].mxu0 %v1027
  %v1178 = vpop.f32.mrb[0].mxu0
  %v1179 = vadd.f32 %v1048, %v1178
  %v1180 = vpop.f32.mrb[0].mxu0
  %v1181 = vadd.f32 %v1048, %v1180
  %1182 = vmatprep.mubr.f32.mxu0 0.0
  %1183 = vmatmul.mubr.f32.gmra.mrb[0].mxu0 %v1028
  %v1184 = vpop.f32.mrb[0].mxu0
  %v1185 = vadd.f32 %v1052, %v1184
  %v1186 = vpop.f32.mrb[0].mxu0
  %v1187 = vadd.f32 %v1052, %v1186
  %1188 = vmatprep.mubr.f32.mxu0 0.0
  %1189 = vmatmul.mubr.f32.gmra.mrb[0].mxu0 %v1029
  %v1190 = vpop.f32.mrb[0].mxu0
  %v1191 = vadd.f32 %v1056, %v1190
  %v1192 = vpop.f32.mrb[0].mxu0
  %v1193 = vadd.f32 %v1056, %v1192
  %1194 = vmatprep.mubr.f32.mxu0 0.0
  %1195 = vmatmul.mubr.f32.gmra.mrb[0].mxu0 %v1030
  %v1196 = vpop.f32.mrb[0].mxu0
  %v1197 = vadd.f32 %v1060, %v1196
  %v1198 = vpop.f32.mrb[0].mxu0
  %v1199 = vadd.f32 %v1060, %v1198
  %1200 = vmatprep.mubr.f32.mxu0 0.0
  %1201 = vmatmul.mubr.f32.gmra.mrb[0].mxu0 %v1031
  %v1202 = vpop.f32.mrb[0].mxu0
  %v1203 = vadd.f32 %v1064, %v1202
  %v1204 = vpop.f32.mrb[0].mxu0
  %v1205 = vadd.f32 %v1064, %v1204
  %1206 = vmatprep.mubr.f32.mxu0 0.0
  %1207 = vmatmul.mubr.f32.gmra.mrb[0].mxu0 %v1032
  %v1208 = vpop.f32.mrb[0].mxu0
  %v1209 = vadd.f32 %v1068, %v1208
  %v1210 = vpop.f32.mrb[0].mxu0
  %v1211 = vadd.f32 %v1068, %v1210
  %1212 = vmatprep.mubr.f32.mxu0 0.0
  %1213 = vmatmul.mubr.f32.gmra.mrb[0].mxu0 %v1033
  %v1214 = vpop.f32.mrb[0].mxu0
  %v1215 = vadd.f32 %v1072, %v1214
  %v1216 = vpop.f32.mrb[0].mxu0
  %v1217 = vadd.f32 %v1072, %v1216
  %1218 = vmatprep.mubr.f32.mxu0 0.0
  %1219 = vmatmul.mubr.f32.gmra.mrb[0].mxu0 %v1034
  %v1220 = vpop.f32.mrb[0].mxu0
  %v1221 = vadd.f32 %v1076, %v1220
  %v1222 = vpop.f32.mrb[0].mxu0
  %v1223 = vadd.f32 %v1076, %v1222
  %1224 = vmatprep.mubr.f32.mxu0 0.0
  %1225 = vmatmul.mubr.f32.gmra.mrb[0].mxu0 %v1035
  %v1226 = vpop.f32.mrb[0].mxu0
  %v1227 = vadd.f32 %v1080, %v1226
  %v1228 = vpop.f32.mrb[0].mxu0
  %v1229 = vadd.f32 %v1080, %v1228
  %1230 = vmatprep.mubr.f32.mxu0 0.0
  %1231 = vmatmul.mubr.f32.gmra.mrb[0].mxu0 %v1036
  %v1232 = vpop.f32.mrb[0].mxu0
  %v1233 = vadd.f32 %v1084, %v1232
  %v1234 = vpop.f32.mrb[0].mxu0
  %v1235 = vadd.f32 %v1084, %v1234
  %1236 = vmatprep.mubr.f32.mxu0 0.0
  %1237 = vmatmul.mubr.f32.gmra.mrb[0].mxu0 %v1037
  %v1238 = vpop.f32.mrb[0].mxu0
  %v1239 = vadd.f32 %v1088, %v1238
  %v1240 = vpop.f32.mrb[0].mxu0
  %v1241 = vadd.f32 %v1088, %v1240
  %1242 = vmatprep.mubr.f32.mxu0 0.0
  %1243 = vmatmul.mubr.f32.gmra.mrb[0].mxu0 %v1038
  %v1244 = vpop.f32.mrb[0].mxu0
  %v1245 = vadd.f32 %v1092, %v1244
  %v1246 = vpop.f32.mrb[0].mxu0
  %v1247 = vadd.f32 %v1092, %v1246
  %1248 = vmatprep.mubr.f32.mxu0 0.0
  %1249 = vmatmul.mubr.f32.gmra.mrb[0].mxu0 %v1039
  %v1250 = vpop.f32.mrb[0].mxu0
  %v1251 = vadd.f32 %v1096, %v1250
  %v1252 = vpop.f32.mrb[0].mxu0
  %v1253 = vadd.f32 %v1096, %v1252
  %1254 = vmatprep.mubr.f32.mxu0 0.0
  %1255 = vmatmul.mubr.f32.gmra.mrb[0].mxu0 %v1040
  %v1256 = vpop.f32.mrb[0].mxu0
  %v1257 = vadd.f32 %v1100, %v1256
  %v1258 = vpop.f32.mrb[0].mxu0
  %v1259 = vadd.f32 %v1100, %v1258
  %1260 = vmatprep.mubr.f32.mxu0 0.0
  %1261 = vmatmul.mubr.f32.gmra.mrb[0].mxu0 %v1041
  %v1262 = vpop.f32.mrb[0].mxu0
  %v1263 = vadd.f32 %v1104, %v1262
  %v1264 = vpop.f32.mrb[0].mxu0
  %v1265 = vadd.f32 %v1104, %v1264
  %1266 = vdwg.mxu0
  %v1267 = vtanh.pop %v1173
  %v1268 = vtanh.pop %v1175
  %v1269 = vtanh.pop %v1179
  %v1270 = vtanh.pop %v1181
  %v1271 = vtanh.pop %v1185
  %v1272 = vtanh.pop %v1187
  %v1273 = vtanh.pop %v1191
  %v1274 = vtanh.pop %v1193
  %v1275 = vtanh.pop %v1197
  %v1276 = vtanh.pop %v1199
  %v1277 = vtanh.pop %v1203
  %v1278 = vtanh.pop %v1205
  %v1279 = vtanh.pop %v1209
  %v1280 = vtanh.pop %v1211
  %v1281 = vtanh.pop %v1215
  %v1282 = vtanh.pop %v1217
  %v1283 = vtanh.pop %v1221
  %v1284 = vtanh.pop %v1223
  %v1285 = vtanh.pop %v1227
  %v1286 = vtanh.pop %v1229
  %v1287 = vtanh.pop %v1233
  %v1288 = vtanh.pop %v1235
  %v1289 = vtanh.pop %v1239
  %v1290 = vtanh.pop %v1241
  %v1291 = vtanh.pop %v1245
  %v1292 = vtanh.pop %v1247
  %v1293 = vtanh.pop %v1251
  %v1294 = vtanh.pop %v1253
  %v1295 = vtanh.pop %v1257
  %v1296 = vtanh.pop %v1259
  %v1297 = vtanh.pop %v1263
  %v1298 = vtanh.pop %v1265
  %v1299 = vld [vmem:[%s3] sm:$0xff]
  %v1300 = vld [vmem:[%s3 + $0x8] sm:$0xff]
  %v1301 = vld [vmem:[%s3 + $0x10] sm:$0xff]
  %v1302 = vld [vmem:[%s3 + $0x18] sm:$0xff]
  %v1303 = vld [vmem:[%s3 + $0x20] sm:$0xff]
  %v1304 = vld [vmem:[%s3 + $0x28] sm:$0xff]
  %v1305 = vld [vmem:[%s3 + $0x30] sm:$0xff]
  %v1306 = vld [vmem:[%s3 + $0x38] sm:$0xff]
  %v1307 = vld [vmem:[%s3 + $0x40] sm:$0xff]
  %v1308 = vld [vmem:[%s3 + $0x48] sm:$0xff]
  %v1309 = vld [vmem:[%s3 + $0x50] sm:$0xff]
  %v1310 = vld [vmem:[%s3 + $0x58] sm:$0xff]
  %v1311 = vld [vmem:[%s3 + $0x60] sm:$0xff]
  %v1312 = vld [vmem:[%s3 + $0x68] sm:$0xff]
  %v1313 = vld [vmem:[%s3 + $0x70] sm:$0xff]
  %v1314 = vld [vmem:[%s3 + $0x78] sm:$0xff]
  %1316 = vset.pattern.permute.xlu0 0
  %1317 = vperm.xlu0 %1316, %v1299
  %v1318 = vpop.permute.xlu0 %1317
  %1321 = vset.pattern.permute.xlu0 0
  %1322 = vperm.xlu0 %1321, %v1300
  %v1323 = vpop.permute.xlu0 %1322
  %1326 = vset.pattern.permute.xlu0 0
  %1327 = vperm.xlu0 %1326, %v1301
  %v1328 = vpop.permute.xlu0 %1327
  %1331 = vset.pattern.permute.xlu0 0
  %1332 = vperm.xlu0 %1331, %v1302
  %v1333 = vpop.permute.xlu0 %1332
  %1336 = vset.pattern.permute.xlu0 0
  %1337 = vperm.xlu0 %1336, %v1303
  %v1338 = vpop.permute.xlu0 %1337
  %1341 = vset.pattern.permute.xlu0 0
  %1342 = vperm.xlu0 %1341, %v1304
  %v1343 = vpop.permute.xlu0 %1342
  %1346 = vset.pattern.permute.xlu0 0
  %1347 = vperm.xlu0 %1346, %v1305
  %v1348 = vpop.permute.xlu0 %1347
  %1351 = vset.pattern.permute.xlu0 0
  %1352 = vperm.xlu0 %1351, %v1306
  %v1353 = vpop.permute.xlu0 %1352
  %1356 = vset.pattern.permute.xlu0 0
  %1357 = vperm.xlu0 %1356, %v1307
  %v1358 = vpop.permute.xlu0 %1357
  %1361 = vset.pattern.permute.xlu0 0
  %1362 = vperm.xlu0 %1361, %v1308
  %v1363 = vpop.permute.xlu0 %1362
  %1366 = vset.pattern.permute.xlu0 0
  %1367 = vperm.xlu0 %1366, %v1309
  %v1368 = vpop.permute.xlu0 %1367
  %1371 = vset.pattern.permute.xlu0 0
  %1372 = vperm.xlu0 %1371, %v1310
  %v1373 = vpop.permute.xlu0 %1372
  %1376 = vset.pattern.permute.xlu0 0
  %1377 = vperm.xlu0 %1376, %v1311
  %v1378 = vpop.permute.xlu0 %1377
  %1381 = vset.pattern.permute.xlu0 0
  %1382 = vperm.xlu0 %1381, %v1312
  %v1383 = vpop.permute.xlu0 %1382
  %1386 = vset.pattern.permute.xlu0 0
  %1387 = vperm.xlu0 %1386, %v1313
  %v1388 = vpop.permute.xlu0 %1387
  %1391 = vset.pattern.permute.xlu0 0
  %1392 = vperm.xlu0 %1391, %v1314
  %v1393 = vpop.permute.xlu0 %1392
  %v1395 = vmul.f32 %v1267, %v1318
  %v1396 = vmul.f32 %v1268, %v1318
  %v1397 = vmul.f32 %v1269, %v1323
  %v1398 = vmul.f32 %v1270, %v1323
  %v1399 = vmul.f32 %v1271, %v1328
  %v1400 = vmul.f32 %v1272, %v1328
  %v1401 = vmul.f32 %v1273, %v1333
  %v1402 = vmul.f32 %v1274, %v1333
  %v1403 = vmul.f32 %v1275, %v1338
  %v1404 = vmul.f32 %v1276, %v1338
  %v1405 = vmul.f32 %v1277, %v1343
  %v1406 = vmul.f32 %v1278, %v1343
  %v1407 = vmul.f32 %v1279, %v1348
  %v1408 = vmul.f32 %v1280, %v1348
  %v1409 = vmul.f32 %v1281, %v1353
  %v1410 = vmul.f32 %v1282, %v1353
  %v1411 = vmul.f32 %v1283, %v1358
  %v1412 = vmul.f32 %v1284, %v1358
  %v1413 = vmul.f32 %v1285, %v1363
  %v1414 = vmul.f32 %v1286, %v1363
  %v1415 = vmul.f32 %v1287, %v1368
  %v1416 = vmul.f32 %v1288, %v1368
  %v1417 = vmul.f32 %v1289, %v1373
  %v1418 = vmul.f32 %v1290, %v1373
  %v1419 = vmul.f32 %v1291, %v1378
  %v1420 = vmul.f32 %v1292, %v1378
  %v1421 = vmul.f32 %v1293, %v1383
  %v1422 = vmul.f32 %v1294, %v1383
  %v1423 = vmul.f32 %v1295, %v1388
  %v1424 = vmul.f32 %v1296, %v1388
  %v1425 = vmul.f32 %v1297, %v1393
  %v1426 = vmul.f32 %v1298, %v1393
  %v1427 = vadd.f32 %v1395, %v1397
  %v1428 = vadd.f32 %v1427, %v1399
  %v1429 = vadd.f32 %v1428, %v1401
  %v1430 = vadd.f32 %v1429, %v1403
  %v1431 = vadd.f32 %v1430, %v1405
  %v1432 = vadd.f32 %v1431, %v1407
  %v1433 = vadd.f32 %v1432, %v1409
  %v1434 = vadd.f32 %v1433, %v1411
  %v1435 = vadd.f32 %v1434, %v1413
  %v1436 = vadd.f32 %v1435, %v1415
  %v1437 = vadd.f32 %v1436, %v1417
  %v1438 = vadd.f32 %v1437, %v1419
  %v1439 = vadd.f32 %v1438, %v1421
  %v1440 = vadd.f32 %v1439, %v1423
  %v1441 = vadd.f32 %v1440, %v1425
  %v1442 = vrot.slane %v1441, 4
  %v1443 = vadd.f32 %v1441, %v1442
  %v1444 = vrot.slane %v1443, 2
  %v1445 = vadd.f32 %v1443, %v1444
  %v1446 = vrot.slane %v1445, 1
  %v1447 = vadd.f32 %v1445, %v1446
  %v1448 = vadd.f32 %v1396, %v1398
  %v1449 = vadd.f32 %v1448, %v1400
  %v1450 = vadd.f32 %v1449, %v1402
  %v1451 = vadd.f32 %v1450, %v1404
  %v1452 = vadd.f32 %v1451, %v1406
  %v1453 = vadd.f32 %v1452, %v1408
  %v1454 = vadd.f32 %v1453, %v1410
  %v1455 = vadd.f32 %v1454, %v1412
  %v1456 = vadd.f32 %v1455, %v1414
  %v1457 = vadd.f32 %v1456, %v1416
  %v1458 = vadd.f32 %v1457, %v1418
  %v1459 = vadd.f32 %v1458, %v1420
  %v1460 = vadd.f32 %v1459, %v1422
  %v1461 = vadd.f32 %v1460, %v1424
  %v1462 = vadd.f32 %v1461, %v1426
  %v1463 = vrot.slane %v1462, 4
  %v1464 = vadd.f32 %v1462, %v1463
  %v1465 = vrot.slane %v1464, 2
  %v1466 = vadd.f32 %v1464, %v1465
  %v1467 = vrot.slane %v1466, 1
  %v1468 = vadd.f32 %v1466, %v1467
  %s1469 = sld [smem:[#allocation2]]
  %v1470 = vstv %s1469
  %v1471 = vadd.f32 %v1447, %v1470
  %v1472 = vadd.f32 %v1468, %v1470
  %v1475 = vcombine.low %v1471, %v1472
  %v1477 = vunpack.c.l.s4 1966171168
  %v1478 = vunpack.c.0.s8 %v1477
  %v1479 = vlaneseq
  %v1480 = vshrl.u32 %v1479, 7
  %v1481 = vsub.s32 %v1478, %v1480
  %v1482 = vrot.slane %v1475, %v1481
  %v1484 = vunpack.c.l.s4 1966171168
  %v1485 = vunpack.c.0.s8 %v1484
  %v1486 = vlaneseq
  %v1487 = vshrl.u32 %v1486, 7
  %v1488 = vsub.s32 %v1485, %v1487
  %v1489 = vrot.slane %v1482, %v1488
  %v1491 = vlaneseq
  %vm1492 = vcmp.ge.s32.totalorder %v1491, 0
  %vm1493 = vcmp.lt.s32.totalorder %v1491, 256
  %vm1494 = vmand %vm1492, %vm1493
  %1495 = vst.msk [vmem:[%s6] sm:$0x3] %vm1494, %v1489
  // Predicated region
  $region26: #{dnn_forward.1} parent=0 // pred_check
    _
  $region27: #{dnn_forward.1} parent=0 // pred_check_branch
    %1497 = sbr.rel (0) target = $region29
  $region28: #{dnn_forward.1} parent=0 // pred_region
    _
  $region29: #{dnn_forward.1} parent=0 // pred_fallthru
    _
  // Predicated region
  $region30: #{dnn_forward.1} parent=0 // pred_check
    _
  $region31: #{dnn_forward.1} parent=0 // pred_check_branch
    %1499 = sbr.rel (0) target = $region33
  $region32: #{dnn_forward.1} parent=0 // pred_region
    _
  $region33: #{dnn_forward.1} parent=0 // pred_fallthru
    _

</llo_original>
